<compile_context>
chip_gen: v5e
topology: v5e:2x2
jax: 0.10.0
libtpu: 0.0.40
codegen_flags: <defaults>
</compile_context>

<pallas_src>
import jax
import jax.numpy as jnp
from jax.experimental import pallas as pl
from jax.experimental.pallas import tpu as pltpu

_LANE = 128
_SUBLANE = 8
# Conservative per-tile VMEM budget (double-buffered X/Y + weight tile + acc),
# sized to fit v5e's 16 MiB default scoped VMEM (v6e/v7x default is 32 MiB).
_VMEM_TILE_BUDGET = 12 * 1024 * 1024


def _round_up(x: int, m: int) -> int:
    return ((x + m - 1) // m) * m


def _linear_kernel(x_ref, w_ref, b_ref, o_ref):
    # x:(TB,K)  w:(K,Np)  b:(1,Np)  o:(TB,Np)  -- W pre-transposed in wrapper.
    acc = jnp.dot(x_ref[...], w_ref[...], preferred_element_type=jnp.float32)
    o_ref[...] = (acc + b_ref[...]).astype(o_ref.dtype)


def _linear_kernel_ktiled(x_ref, w_ref, b_ref, o_ref, acc_ref):
    # Contraction axis tiled over grid axis 1 (marked "arbitrary").
    k = pl.program_id(1)

    @pl.when(k == 0)
    def _():
        acc_ref[...] = jnp.zeros_like(acc_ref)

    acc_ref[...] += jnp.dot(x_ref[...], w_ref[...],
                            preferred_element_type=jnp.float32)

    @pl.when(k == pl.num_programs(1) - 1)
    def _():
        o_ref[...] = (acc_ref[...] + b_ref[...]).astype(o_ref.dtype)


def torch_module_forward(x, w, b, *, tile_batch=None, tile_k=None,
                         compute_dtype=None, allow_xla_fallback=False):
    """nn.Linear forward: Y = X @ W.T + b.

    x: (batch, input_size), w: (output_size, input_size) [PyTorch layout],
    b: (output_size,).  Returns (batch, output_size).
    """
    batch, k_dim = x.shape
    n_dim, k_dim_w = w.shape
    assert k_dim == k_dim_w and b.shape == (n_dim,)
    out_dtype = x.dtype

    # Tiny problems: a fused XLA op beats any pallas_call launch + DMA setup.
    if allow_xla_fallback and batch * k_dim <= 128 * 128 and n_dim <= 128:
        return (x @ w.T + b).astype(out_dtype)

    # (1) One-time wrapper transpose -> MXU-natural (K, N) weight layout.
    wt = w.T

    # (2) Lane-dense output: pad N to a multiple of 128; slice afterwards.
    n_pad = _round_up(n_dim, _LANE)
    if n_pad != n_dim:
        wt = jnp.pad(wt, ((0, 0), (0, n_pad - n_dim)))
        b = jnp.pad(b, (0, n_pad - n_dim))
    b2d = b.reshape(1, n_pad).astype(jnp.float32)

    # (3) Optional reduced-precision inputs (v6e/v7x); accumulation stays f32.
    if compute_dtype is not None:
        x = x.astype(compute_dtype)
        wt = wt.astype(compute_dtype)
    itemsize = jnp.dtype(x.dtype).itemsize

    # (4) K-tiling for large weights (bounds resident weight; key on v7x VMEM).
    if tile_k is None:
        if k_dim * n_pad * itemsize > 8 * 1024 * 1024 and k_dim > _LANE:
            tile_k = max(_LANE,
                         ((2 * 1024 * 1024) // (n_pad * itemsize)) // _LANE * _LANE)
            if tile_k >= k_dim:
                tile_k = None
    elif tile_k >= k_dim or k_dim <= _LANE:
        tile_k = None
    else:
        tile_k = max(_LANE, (tile_k // _LANE) * _LANE)
    ktiled = tile_k is not None

    # (5) Batch tile: multiple of 8, <=512 rows, >=2 "parallel" steps if possible.
    if tile_batch is None:
        if batch <= 16:
            tile_batch = _round_up(batch, _SUBLANE)
        else:
            tile_batch = min(512, _round_up((batch + 1) // 2, _SUBLANE))
    tile_batch = max(_SUBLANE, _round_up(tile_batch, _SUBLANE))
    tile_batch = min(tile_batch, _round_up(batch, _SUBLANE))

    # (6) VMEM budget: shrink the batch tile until the working set fits.
    def _tile_bytes(tb):
        tk_eff = tile_k if ktiled else k_dim
        xy = 2 * tb * tk_eff * itemsize + 2 * tb * n_pad * 4
        w_bufs = 2 if ktiled else 1          # single-buffered resident weight
        wbytes = w_bufs * tk_eff * n_pad * itemsize
        acc = tb * n_pad * 4 if ktiled else 0
        return xy + wbytes + acc + n_pad * 4

    while tile_batch > _SUBLANE and _tile_bytes(tile_batch) > _VMEM_TILE_BUDGET:
        tile_batch = max(_SUBLANE, (tile_batch // 2) // _SUBLANE * _SUBLANE)

    # (7) Zero-pad batch (and K when K-tiled) so the grid divides evenly.
    padded_batch = _round_up(batch, tile_batch)
    if padded_batch != batch:
        x = jnp.pad(x, ((0, padded_batch - batch), (0, 0)))
    if ktiled:
        k_padded = _round_up(k_dim, tile_k)
        if k_padded != k_dim:
            x = jnp.pad(x, ((0, 0), (0, k_padded - k_dim)))
            wt = jnp.pad(wt, ((0, k_padded - k_dim), (0, 0)))
    else:
        k_padded = k_dim

    if not ktiled:
        grid = (padded_batch // tile_batch,)
        kernel = _linear_kernel
        in_specs = [
            pl.BlockSpec((tile_batch, k_padded), lambda i: (i, 0)),
            # Constant index_map => fetched once; keep only one copy in VMEM.
            pl.BlockSpec((k_padded, n_pad), lambda i: (0, 0),
                         pipeline_mode=pl.Buffered(1)),
            pl.BlockSpec((1, n_pad), lambda i: (0, 0),
                         pipeline_mode=pl.Buffered(1)),
        ]
        out_specs = pl.BlockSpec((tile_batch, n_pad), lambda i: (i, 0))
        scratch_shapes = []
        dim_sem = ("parallel",)
    else:
        grid = (padded_batch // tile_batch, k_padded // tile_k)
        kernel = _linear_kernel_ktiled
        in_specs = [
            pl.BlockSpec((tile_batch, tile_k), lambda i, kk: (i, kk)),
            pl.BlockSpec((tile_k, n_pad), lambda i, kk: (kk, 0)),
            pl.BlockSpec((1, n_pad), lambda i, kk: (0, 0),
                         pipeline_mode=pl.Buffered(1)),
        ]
        out_specs = pl.BlockSpec((tile_batch, n_pad), lambda i, kk: (i, 0))
        scratch_shapes = [pltpu.VMEM((tile_batch, n_pad), jnp.float32)]
        dim_sem = ("parallel", "arbitrary")

    out = pl.pallas_call(
        kernel,
        out_shape=jax.ShapeDtypeStruct((padded_batch, n_pad), out_dtype),
        grid_spec=pltpu.PrefetchScalarGridSpec(
            num_scalar_prefetch=0,
            grid=grid,
            in_specs=in_specs,
            out_specs=out_specs,
            scratch_shapes=scratch_shapes,
        ),
        compiler_params=pltpu.CompilerParams(dimension_semantics=dim_sem),
    )(x, wt, b2d)

    return out[:batch, :n_dim]


if __name__ == "__main__":
    key = jax.random.PRNGKey(0)

    def make_inputs(case_key, batch, input_size, output_size):
        kx, kw, kb = jax.random.split(case_key, 3)
        x = jax.random.normal(kx, (batch, input_size), dtype=jnp.float32)
        bound = 1.0 / float(input_size) ** 0.5   # PyTorch nn.Linear-style init
        w = jax.random.uniform(kw, (output_size, input_size), dtype=jnp.float32,
                               minval=-bound, maxval=bound)
        b = jax.random.uniform(kb, (output_size,), dtype=jnp.float32,
                               minval=-bound, maxval=bound)
        return x, w, b

    cases = [
        # (batch, input_size, output_size, kwargs)
        (256, 128, 64, dict(tile_batch=64)),   # batch-tiled grid, N padded to 128
        (10, 32, 16, dict()),                  # tiny + non-divisible batch (padding)
        (64, 256, 128, dict(tile_k=128)),      # K-tiled accumulator path
    ]
    keys = jax.random.split(key, len(cases))
    for case_key, (batch, input_size, output_size, kwargs) in zip(keys, cases):
        x, w, b = make_inputs(case_key, batch, input_size, output_size)
        y = jax.block_until_ready(torch_module_forward(x, w, b, **kwargs))
        y_ref = x @ w.T + b
        assert y.shape == (batch, output_size)
        assert jnp.allclose(y, y_ref, atol=1e-4, rtol=1e-4), (
            f"mismatch vs reference for case {(batch, input_size, output_size)}")

    print("KERNEL_OK")
</pallas_src>

<mosaic_0001>
module attributes {stable_mosaic.version = 11 : i64} {
  func.func @_linear_kernel(%arg0: i32, %arg1: memref<64x128xf32, #tpu.memory_space<vmem>>, %arg2: memref<128x128xf32, #tpu.memory_space<vmem>>, %arg3: memref<1x128xf32, #tpu.memory_space<vmem>>, %arg4: memref<64x128xf32, #tpu.memory_space<vmem>>) attributes {dimension_semantics = [#tpu.dimension_semantics<parallel>], iteration_bounds = array<i64: 4>, scalar_prefetch = 0 : i64, scratch_operands = 0 : i64, tpu.core_type = #tpu.core_type<tc>, window_params = [{transform_indices = @transform_0, window_bounds = array<i64: 64, 128>}, {pipeline_mode = #tpu.pipeline_mode<synchronous>, transform_indices = @transform_1, window_bounds = array<i64: 128, 128>}, {pipeline_mode = #tpu.pipeline_mode<synchronous>, transform_indices = @transform_2, window_bounds = array<i64: 1, 128>}, {transform_indices = @transform_3, window_bounds = array<i64: 64, 128>}]} {
    %c0 = arith.constant 0 : index
    %c0_0 = arith.constant 0 : index
    %0 = vector.load %arg1[%c0, %c0_0] : memref<64x128xf32, #tpu.memory_space<vmem>>, vector<64x128xf32>
    %c0_1 = arith.constant 0 : index
    %c0_2 = arith.constant 0 : index
    %1 = vector.load %arg2[%c0_1, %c0_2] : memref<128x128xf32, #tpu.memory_space<vmem>>, vector<128x128xf32>
    %cst = arith.constant dense<0.000000e+00> : vector<64x128xf32>
    %2 = tpu.matmul %0, %1, %cst {dimension_numbers = #tpu.dot_dimension_numbers<[1], [0], [0], [1], [0, 0, 1, 1], [], []>} : vector<64x128xf32>, vector<128x128xf32>, vector<64x128xf32> -> vector<64x128xf32>
    %c0_3 = arith.constant 0 : index
    %c0_4 = arith.constant 0 : index
    %3 = vector.load %arg3[%c0_3, %c0_4] : memref<1x128xf32, #tpu.memory_space<vmem>>, vector<1x128xf32>
    %4 = vector.broadcast %3 : vector<1x128xf32> to vector<64x128xf32>
    %5 = arith.addf %2, %4 : vector<64x128xf32>
    %c0_5 = arith.constant 0 : index
    %c0_6 = arith.constant 0 : index
    %6 = vector.load %arg4[%c0_5, %c0_6] : memref<64x128xf32, #tpu.memory_space<vmem>>, vector<64x128xf32>
    tpu.vector_store %arg4[%c0_5, %c0_6], %5 {strides = array<i32>} : memref<64x128xf32, #tpu.memory_space<vmem>>, vector<64x128xf32>,
    return
  }
  func.func @transform_0(%arg0: i32) -> (i32, i32) {
    %c0_i32 = arith.constant 0 : i32
    %c0_i32_0 = arith.constant 0 : i32
    return %arg0, %c0_i32 : i32, i32
  }
  func.func @transform_1(%arg0: i32) -> (i32, i32) {
    %c0_i32 = arith.constant 0 : i32
    %c0_i32_0 = arith.constant 0 : i32
    %c0_i32_1 = arith.constant 0 : i32
    return %c0_i32, %c0_i32_0 : i32, i32
  }
  func.func @transform_2(%arg0: i32) -> (i32, i32) {
    %c0_i32 = arith.constant 0 : i32
    %c0_i32_0 = arith.constant 0 : i32
    %c0_i32_1 = arith.constant 0 : i32
    return %c0_i32, %c0_i32_0 : i32, i32
  }
  func.func @transform_3(%arg0: i32) -> (i32, i32) {
    %c0_i32 = arith.constant 0 : i32
    %c0_i32_0 = arith.constant 0 : i32
    return %arg0, %c0_i32 : i32, i32
  }
}

</mosaic_0001>

<llo_original>
// kernel: tpu_custom_call.1
$region0: #{tpu_custom_call.1}
  #allocation0 [shape = 'u32[]', space=smem, size = 0x4, offset = 0x4, fixed_abs, tag = 'smem constant byte address 0x4 - core index']
  #allocation1 [shape = 'u32[72,128]{1,0:T(1,128)}', space=vmem, size = 0x9000, scoped, tag = 'internal scratch']
  %s0 = inlined_call_operand.hbm [shape: f32[256,128], index: 0, kind: input, shape index: {}]
  %s1 = inlined_call_operand.hbm [shape: f32[128,128], index: 1, kind: input, shape index: {}]
  %s2 = inlined_call_operand.vmem [shape: f32[1,128], index: 2, kind: input, shape index: {}]
  %s3 = inlined_call_operand.hbm [shape: f32[256,128], index: 3, kind: output, shape index: {}]
  %s4 = sld [smem:[#allocation0]]
  $region53: #{tpu_custom_call.1} parent=0
    _
  %s6 = ssub.s32 1, %s4
  %s7 = scalar_select 0, %s6, %s4
  $region1: #{tpu_custom_call.1} parent=0
    #allocation2 [shape = 'u8[65536]{0}', space=vmem, size = 0x10000, scoped, tag = 'input window, operand 0']
    #allocation3 [shape = 's32[2]{0}', space=sflag, size = 0x8, scoped, tag = 'scoped memory for tpu_custom_call.1']
    #allocation4 [shape = 's32[2]{0}', space=sflag, size = 0x8, scoped, tag = 'scoped memory for tpu_custom_call.1']
    #allocation5 [shape = 'u8[65536]{0}', space=vmem, size = 0x10000, scoped, tag = 'input window, operand 1, single buffered']
    #allocation6 [shape = 's32[1]{0}', space=sflag, size = 0x4, scoped, tag = 'scoped memory for tpu_custom_call.1']
    #allocation7 [shape = 'u8[65536]{0}', space=vmem, size = 0x10000, scoped, tag = 'output window, operand 0']
    %8 = vsyncpa [#allocation3], 0
    %s9 = scalar_lea.sflag [#allocation3], 1
    %10 = vsyncpa %s9, 0
    %11 = vsyncpa [#allocation6], 0
    %12 = vsyncpa [#allocation4], 0
    %s13 = scalar_lea.sflag [#allocation4], 1
    %14 = vsyncpa %s13, 0
    loop: start=0, step=1, limit=6
    $region2: #{tpu_custom_call.1} parent=1 // loop_pre_header
      _
    $region3: #{tpu_custom_call.1} parent=1 // loop_header
      %s16 = sphi 0, %s20
      %p17 = scmp.ge.s32.totalorder %s16, 6
      %s26 = sphi 0, %s28
      %s29 = sphi 0, %s26
      %s30 = sphi 0, %s29
      %s46 = sphi 0, %s30
      %s50 = sphi 0, %s50
      %s52 = sphi 0, %s50
      %s53 = sphi 0, %s52
      %s67 = sphi 0, %s53
      %s71 = sphi 0, %s71
      %s73 = sphi 0, %s71
      %s74 = sphi 0, %s73
      %s88 = sphi 0, %s74
      %s94 = sphi 0, %s96
      %s97 = sphi 0, %s94
      %s98 = sphi 0, %s97
      %s114 = sphi 0, %s98
    $region4: #{tpu_custom_call.1} parent=1 // loop_header_branch
      %19 = sbr.rel (%p17) target = $region8
    $region5: #{tpu_custom_call.1} parent=1 // loop_body
      %s21 = ssub.s32 %s16, 1
      %s22 = ssub.s32 %s16, 2
      %s23 = sadd.s32 %s16, 1
      %s24 = ssub.s32 %s16, %s23
      %p25 = scmp.eq.s32.totalorder %s24, 0
      %s27 = sadd.s32 %s26, 1
      %s28 = scalar_select %p25, %s26, %s27
      %p31 = pneg %p25
      %p32 = scmp.eq.s32.totalorder %s16, 3
      %p33 = por %p31, %p32
      %p34 = scmp.ne.s32.totalorder %s26, %s29
      %p35 = scmp.eq.s32.totalorder %s16, 0
      %p36 = por %p34, %p35
      %p37 = scmp.ne.s32.totalorder %s26, %s29
      %p38 = scmp.eq.s32.totalorder %s21, 3
      %p39 = por %p37, %p38
      %p40 = scmp.ne.s32.totalorder %s29, %s30
      %p41 = scmp.eq.s32.totalorder %s21, 0
      %p42 = por %p40, %p41
      %p43 = scmp.ne.s32.totalorder %s29, %s30
      %p44 = scmp.eq.s32.totalorder %s22, 3
      %p45 = por %p43, %p44
      %p47 = scmp.ne.s32.totalorder %s30, %s46
      %p48 = scmp.eq.s32.totalorder %s22, 0
      %p49 = por %p47, %p48
      %s51 = sadd.s32 %s50, 1
      %p54 = scmp.eq.s32.totalorder %s16, 3
      %p55 = scmp.ne.s32.totalorder %s50, %s52
      %p56 = scmp.eq.s32.totalorder %s16, 0
      %p57 = por %p55, %p56
      %p58 = scmp.ne.s32.totalorder %s50, %s52
      %p59 = scmp.eq.s32.totalorder %s21, 3
      %p60 = por %p58, %p59
      %p61 = scmp.ne.s32.totalorder %s52, %s53
      %p62 = scmp.eq.s32.totalorder %s21, 0
      %p63 = por %p61, %p62
      %p64 = scmp.ne.s32.totalorder %s52, %s53
      %p65 = scmp.eq.s32.totalorder %s22, 3
      %p66 = por %p64, %p65
      %p68 = scmp.ne.s32.totalorder %s53, %s67
      %p69 = scmp.eq.s32.totalorder %s22, 0
      %p70 = por %p68, %p69
      %s72 = sadd.s32 %s71, 1
      %p75 = scmp.eq.s32.totalorder %s16, 3
      %p76 = scmp.ne.s32.totalorder %s71, %s73
      %p77 = scmp.eq.s32.totalorder %s16, 0
      %p78 = por %p76, %p77
      %p79 = scmp.ne.s32.totalorder %s71, %s73
      %p80 = scmp.eq.s32.totalorder %s21, 3
      %p81 = por %p79, %p80
      %p82 = scmp.ne.s32.totalorder %s73, %s74
      %p83 = scmp.eq.s32.totalorder %s21, 0
      %p84 = por %p82, %p83
      %p85 = scmp.ne.s32.totalorder %s73, %s74
      %p86 = scmp.eq.s32.totalorder %s22, 3
      %p87 = por %p85, %p86
      %p89 = scmp.ne.s32.totalorder %s74, %s88
      %p90 = scmp.eq.s32.totalorder %s22, 0
      %p91 = por %p89, %p90
      %s92 = ssub.s32 %s16, %s23
      %p93 = scmp.eq.s32.totalorder %s92, 0
      %s95 = sadd.s32 %s94, 1
      %s96 = scalar_select %p93, %s94, %s95
      %p99 = pneg %p93
      %p100 = scmp.eq.s32.totalorder %s16, 3
      %p101 = por %p99, %p100
      %p102 = scmp.ne.s32.totalorder %s94, %s97
      %p103 = scmp.eq.s32.totalorder %s16, 0
      %p104 = por %p102, %p103
      %p105 = scmp.ne.s32.totalorder %s94, %s97
      %p106 = scmp.eq.s32.totalorder %s21, 3
      %p107 = por %p105, %p106
      %p108 = scmp.ne.s32.totalorder %s97, %s98
      %p109 = scmp.eq.s32.totalorder %s21, 0
      %p110 = por %p108, %p109
      %p111 = scmp.ne.s32.totalorder %s97, %s98
      %p112 = scmp.eq.s32.totalorder %s22, 3
      %p113 = por %p111, %p112
      %p115 = scmp.ne.s32.totalorder %s98, %s114
      %p116 = scmp.eq.s32.totalorder %s22, 0
      %p117 = por %p115, %p116
      %p118 = scmp.le.s32.totalorder 1, %s16
      %p119 = scmp.lt.s32.totalorder %s16, 5
      %p120 = pnand %p118, %p119
      %p121 = pneg %p120
      // Predicated region
      $region9: #{tpu_custom_call.1} parent=5 // pred_check
        _
      $region10: #{tpu_custom_call.1} parent=5 // pred_check_branch
        %123 = sbr.rel (%p120) target = $region12
      $region11: #{tpu_custom_call.1} parent=5 // pred_region
        %s124 = ssub.s32 %s16, 1
        // Predicated region
        $region13: #{tpu_custom_call.1} parent=11 // pred_check
          %p125 = pneg %p63
        $region14: #{tpu_custom_call.1} parent=11 // pred_check_branch
          %127 = sbr.rel (%p125) target = $region16
        $region15: #{tpu_custom_call.1} parent=11 // pred_region
          %129 = vsyncadd [#allocation6], 0
          %s130 = sshll.u32 %s1, 4
          %s131 = int_to_ptr.hbm [resolvable:$true] %s130
          %s132 = sshll.u32 [#allocation5], 4
          %s133 = int_to_ptr.vmem [resolvable:$true] %s132
          %138 = dma.hbm_to_vmem [thread:$0]  %s131, 2048, %s133, [#allocation6], 128, 128, 8
        $region16: #{tpu_custom_call.1} parent=11 // pred_fallthru
          _
        // Predicated region
        $region17: #{tpu_custom_call.1} parent=11 // pred_check
          %p139 = pneg %p84
        $region18: #{tpu_custom_call.1} parent=11 // pred_check_branch
          %141 = sbr.rel (%p139) target = $region20
        $region19: #{tpu_custom_call.1} parent=11 // pred_region
          _
        $region20: #{tpu_custom_call.1} parent=11 // pred_fallthru
          _
      $region12: #{tpu_custom_call.1} parent=5 // pred_fallthru
        _
      %p142 = scmp.lt.s32.totalorder %s16, 4
      // Predicated region
      $region21: #{tpu_custom_call.1} parent=5 // pred_check
        %p143 = pneg %p142
      $region22: #{tpu_custom_call.1} parent=5 // pred_check_branch
        %145 = sbr.rel (%p143) target = $region24
      $region23: #{tpu_custom_call.1} parent=5 // pred_region
        // Predicated region
        $region25: #{tpu_custom_call.1} parent=23 // pred_check
          %p146 = pneg %p36
        $region26: #{tpu_custom_call.1} parent=23 // pred_check_branch
          %148 = sbr.rel (%p146) target = $region28
        $region27: #{tpu_custom_call.1} parent=23 // pred_region
          %s149 = sand.u32 %s26, 1
          %s150 = scalar_lea.sflag [#allocation3], %s149
          %s151 = sand.u32 %s26, 1
          %s152 = smul.addr %s151, 64
          %s153 = scalar_lea.vmem [#allocation2], %s152
          %s154 = smul.u32 8, %s16
          %156 = vsyncadd %s150, 0
          %s157 = smul.addr %s154, 8
          %s158 = scalar_lea.hbm %s0, %s157
          %s159 = sshll.u32 %s158, 4
          %s160 = int_to_ptr.hbm [resolvable:$true] %s159
          %s161 = sshll.u32 %s153, 4
          %s162 = int_to_ptr.vmem [resolvable:$true] %s161
          %167 = dma.hbm_to_vmem [thread:$0]  %s160, 1024, %s162, %s150, 128, 128, 8
        $region28: #{tpu_custom_call.1} parent=23 // pred_fallthru
          _
      $region24: #{tpu_custom_call.1} parent=5 // pred_fallthru
        _
      %p168 = scmp.le.s32.totalorder 1, %s16
      %p169 = scmp.lt.s32.totalorder %s16, 5
      %p170 = pnand %p168, %p169
      %p171 = pneg %p170
      // Predicated region
      $region29: #{tpu_custom_call.1} parent=5 // pred_check
        _
      $region30: #{tpu_custom_call.1} parent=5 // pred_check_branch
        %173 = sbr.rel (%p170) target = $region32
      $region31: #{tpu_custom_call.1} parent=5 // pred_region
        %s174 = ssub.s32 %s16, 1
        %s175 = sand.u32 %s29, 1
        %s176 = scalar_lea.sflag [#allocation3], %s175
        %s177 = sand.u32 %s29, 1
        %s178 = smul.addr %s177, 64
        %s179 = scalar_lea.vmem [#allocation2], %s178
        // Predicated region
        $region33: #{tpu_custom_call.1} parent=31 // pred_check
          %p180 = pneg %p42
        $region34: #{tpu_custom_call.1} parent=31 // pred_check_branch
          %182 = sbr.rel (%p180) target = $region36
        $region35: #{tpu_custom_call.1} parent=31 // pred_region
          %184 = dma.done %s176, 1024
        $region36: #{tpu_custom_call.1} parent=31 // pred_fallthru
          _
        // Predicated region
        $region37: #{tpu_custom_call.1} parent=31 // pred_check
          %p185 = pneg %p63
        $region38: #{tpu_custom_call.1} parent=31 // pred_check_branch
          %187 = sbr.rel (%p185) target = $region40
        $region39: #{tpu_custom_call.1} parent=31 // pred_region
          %189 = dma.done [#allocation6], 2048
        $region40: #{tpu_custom_call.1} parent=31 // pred_fallthru
          _
        %s190 = sand.u32 %s29, 1
        %s191 = scalar_lea.sflag [#allocation3], %s190
        %s192 = sand.u32 %s29, 1
        %s193 = smul.addr %s192, 64
        %s194 = scalar_lea.vmem [#allocation2], %s193
        %p195 = pneg %p42
        %p196 = pneg %p39
        %p197 = pneg %p63
        %p198 = pneg %p60
        %p199 = pneg %p84
        %p200 = pneg %p81
        %p201 = pneg %p110
        %p202 = pneg %p107
        %s203 = sand.u32 %s97, 1
        %s204 = scalar_lea.sflag [#allocation4], %s203
        %s205 = sand.u32 %s97, 1
        %s206 = smul.addr %s205, 64
        %s207 = scalar_lea.vmem [#allocation7], %s206
        %s208 = smul.u32 8, %s21
        %s209 = smul.u32 8, %s21
        %v210 = vld [vmem:[%s179] sm:$0xff]
        %v211 = vld [vmem:[%s179 + $0x8] sm:$0xff]
        %v212 = vld [vmem:[%s179 + $0x10] sm:$0xff]
        %v213 = vld [vmem:[%s179 + $0x18] sm:$0xff]
        %v214 = vld [vmem:[%s179 + $0x20] sm:$0xff]
        %v215 = vld [vmem:[%s179 + $0x28] sm:$0xff]
        %v216 = vld [vmem:[%s179 + $0x30] sm:$0xff]
        %v217 = vld [vmem:[%s179 + $0x38] sm:$0xff]
        %v218 = vld [vmem:[#allocation5] sm:$0xff]
        %v219 = vld [vmem:[#allocation5 + $0x8] sm:$0xff]
        %v220 = vld [vmem:[#allocation5 + $0x10] sm:$0xff]
        %v221 = vld [vmem:[#allocation5 + $0x18] sm:$0xff]
        %v222 = vld [vmem:[#allocation5 + $0x20] sm:$0xff]
        %v223 = vld [vmem:[#allocation5 + $0x28] sm:$0xff]
        %v224 = vld [vmem:[#allocation5 + $0x30] sm:$0xff]
        %v225 = vld [vmem:[#allocation5 + $0x38] sm:$0xff]
        %v226 = vld [vmem:[#allocation5 + $0x40] sm:$0xff]
        %v227 = vld [vmem:[#allocation5 + $0x48] sm:$0xff]
        %v228 = vld [vmem:[#allocation5 + $0x50] sm:$0xff]
        %v229 = vld [vmem:[#allocation5 + $0x58] sm:$0xff]
        %v230 = vld [vmem:[#allocation5 + $0x60] sm:$0xff]
        %v231 = vld [vmem:[#allocation5 + $0x68] sm:$0xff]
        %v232 = vld [vmem:[#allocation5 + $0x70] sm:$0xff]
        %v233 = vld [vmem:[#allocation5 + $0x78] sm:$0xff]
        %v234 = vld [vmem:[%s2] sm:$0x1]
        %v236 = vperm.slane %v234, 0
        %238 = vmatpush.msra.mxu0 %v233
        %239 = vmatpush.msra.mxu0 %v232
        %240 = vmatpush.msra.mxu0 %v231
        %241 = vmatpush.msra.mxu0 %v230
        %242 = vmatpush.msra.mxu0 %v229
        %243 = vmatpush.msra.mxu0 %v228
        %244 = vmatpush.msra.mxu0 %v227
        %245 = vmatpush.msra.mxu0 %v226
        %246 = vmatpush.msra.mxu0 %v225
        %247 = vmatpush.msra.mxu0 %v224
        %248 = vmatpush.msra.mxu0 %v223
        %249 = vmatpush.msra.mxu0 %v222
        %250 = vmatpush.msra.mxu0 %v221
        %251 = vmatpush.msra.mxu0 %v220
        %252 = vmatpush.msra.mxu0 %v219
        %253 = vmatpush.msra.mxu0 %v218
        %254 = vmatmul.f32.gmra.mxu0 %v210
        %v255 = vpop.f32.mrf.mxu0
        %v256 = vadd.f32 %v236, %v255
        %257 = vmatmul.f32.gmra.mxu0 %v211
        %v258 = vpop.f32.mrf.mxu0
        %v259 = vadd.f32 %v236, %v258
        %260 = vmatmul.f32.gmra.mxu0 %v212
        %v261 = vpop.f32.mrf.mxu0
        %v262 = vadd.f32 %v236, %v261
        %263 = vmatmul.f32.gmra.mxu0 %v213
        %v264 = vpop.f32.mrf.mxu0
        %v265 = vadd.f32 %v236, %v264
        %266 = vmatmul.f32.gmra.mxu0 %v214
        %v267 = vpop.f32.mrf.mxu0
        %v268 = vadd.f32 %v236, %v267
        %269 = vmatmul.f32.gmra.mxu0 %v215
        %v270 = vpop.f32.mrf.mxu0
        %v271 = vadd.f32 %v236, %v270
        %272 = vmatmul.f32.gmra.mxu0 %v216
        %v273 = vpop.f32.mrf.mxu0
        %v274 = vadd.f32 %v236, %v273
        %275 = vmatmul.f32.gmra.mxu0 %v217
        %v276 = vpop.f32.mrf.mxu0
        %v277 = vadd.f32 %v236, %v276
        %278 = vdwg.mxu0
        %279 = vst [vmem:[%s207] sm:$0xff] %v256
        %280 = vst [vmem:[%s207 + $0x8] sm:$0xff] %v259
        %281 = vst [vmem:[%s207 + $0x10] sm:$0xff] %v262
        %282 = vst [vmem:[%s207 + $0x18] sm:$0xff] %v265
        %283 = vst [vmem:[%s207 + $0x20] sm:$0xff] %v268
        %284 = vst [vmem:[%s207 + $0x28] sm:$0xff] %v271
        %285 = vst [vmem:[%s207 + $0x30] sm:$0xff] %v274
        %286 = vst [vmem:[%s207 + $0x38] sm:$0xff] %v277
        %s287 = sand.u32 %s97, 1
        %s288 = scalar_lea.sflag [#allocation4], %s287
        %s289 = sand.u32 %s97, 1
        %s290 = smul.addr %s289, 64
        %s291 = scalar_lea.vmem [#allocation7], %s290
        // Predicated region
        $region41: #{tpu_custom_call.1} parent=31 // pred_check
          %p292 = pneg %p107
        $region42: #{tpu_custom_call.1} parent=31 // pred_check_branch
          %294 = sbr.rel (%p292) target = $region44
        $region43: #{tpu_custom_call.1} parent=31 // pred_region
          %s295 = smul.u32 8, %s21
          %297 = vsyncadd %s288, 0
          %s298 = smul.addr %s295, 8
          %s299 = scalar_lea.hbm %s3, %s298
          %s300 = sshll.u32 %s291, 4
          %s301 = int_to_ptr.vmem [resolvable:$true] %s300
          %s302 = sshll.u32 %s299, 4
          %s303 = int_to_ptr.hbm [resolvable:$true] %s302
          %308 = dma.vmem_to_hbm [thread:$0]  %s301, 1024, %s303, %s288, 128, 128, 8
        $region44: #{tpu_custom_call.1} parent=31 // pred_fallthru
          _
      $region32: #{tpu_custom_call.1} parent=5 // pred_fallthru
        _
      %p309 = scmp.le.s32.totalorder 2, %s16
      // Predicated region
      $region45: #{tpu_custom_call.1} parent=5 // pred_check
        %p310 = pneg %p309
      $region46: #{tpu_custom_call.1} parent=5 // pred_check_branch
        %312 = sbr.rel (%p310) target = $region48
      $region47: #{tpu_custom_call.1} parent=5 // pred_region
        %s313 = ssub.s32 %s16, 2
        // Predicated region
        $region49: #{tpu_custom_call.1} parent=47 // pred_check
          %p314 = pneg %p113
        $region50: #{tpu_custom_call.1} parent=47 // pred_check_branch
          %316 = sbr.rel (%p314) target = $region52
        $region51: #{tpu_custom_call.1} parent=47 // pred_region
          %s317 = sand.u32 %s98, 1
          %s318 = scalar_lea.sflag [#allocation4], %s317
          %s319 = sand.u32 %s98, 1
          %s320 = smul.addr %s319, 64
          %s321 = scalar_lea.vmem [#allocation7], %s320
          %323 = dma.done %s318, 1024
        $region52: #{tpu_custom_call.1} parent=47 // pred_fallthru
          _
      $region48: #{tpu_custom_call.1} parent=5 // pred_fallthru
        _
    $region6: #{tpu_custom_call.1} parent=1 // loop_footer
      %s20 = sadd.s32 1, %s16
    $region7: #{tpu_custom_call.1} parent=1 // loop_footer_branch
      %15 = sbr.rel target = $region3
    $region8: #{tpu_custom_call.1} parent=1 // loop_exit
      _
    %324 = vsyncpa [#allocation3], 1
    %s325 = scalar_lea.sflag [#allocation3], 1
    %326 = vsyncpa %s325, 1
    %327 = vsyncpa [#allocation6], 1
    %328 = vsyncpa [#allocation4], 1
    %s329 = scalar_lea.sflag [#allocation4], 1
    %330 = vsyncpa %s329, 1

</llo_original>
